<compile_context>
chip_gen: v6e
topology: v6e:2x2x1
jax: 0.10.0
libtpu: 0.0.40
codegen_flags: <defaults>
</compile_context>

<pallas_src>
import math

import jax
import jax.numpy as jnp
from jax import lax
from jax.experimental import pallas as pl
from jax.experimental.pallas import tpu as pltpu


# --------------------------------------------------------------------------- #
# Kernels
# --------------------------------------------------------------------------- #
def _make_mask_kernel(in_size, out_size):
    """Pre-pass: (1, Np) mask from the transposed weight + threshold."""
    inv_in = float(1.0 / in_size)
    inv_out = float(1.0 / out_size)

    def kernel(thr_ref, wt_ref, mask_ref):
        k = pl.program_id(0)

        @pl.when(k == 0)
        def _init():
            mask_ref[...] = jnp.zeros_like(mask_ref)

        # Sublane (axis=0) reduction of |w| -> lane-dense (1, Np) partial sums,
        # accumulated directly in the resident output block.
        mask_ref[...] += jnp.sum(jnp.abs(wt_ref[...]), axis=0, keepdims=True)

        @pl.when(k == pl.num_programs(0) - 1)
        def _finalize():
            mean_w = mask_ref[...] * inv_in                    # (1, Np)
            # threshold.data.fill_(0.0) if threshold < 0
            thr = jnp.maximum(thr_ref[0], jnp.float32(0.0))
            # BinaryStep forward: (x > 0).float()  (strict comparison)
            m = (mean_w - thr > 0.0).astype(jnp.float32)
            # global ratio <= 1% fallback: reset threshold to 0, recompute
            ratio = jnp.sum(m) * inv_out
            fallback = (mean_w > 0.0).astype(jnp.float32)
            mask_ref[...] = jnp.where(ratio <= 0.01, fallback, m)

    return kernel


def _matmul_mask_kernel(x_ref, wt_ref, mask_ref, b_ref, out_ref):
    """Main kernel: x @ w.T accumulated in the resident output block, then
    column-scaled by the mask and biased at the last K step."""
    k = pl.program_id(2)

    @pl.when(k == 0)
    def _init():
        out_ref[...] = jnp.zeros_like(out_ref)

    # Canonical (M,K) x (K,N) MXU feed; accumulate straight into out_ref (f32).
    out_ref[...] += jnp.dot(x_ref[...], wt_ref[...],
                            preferred_element_type=jnp.float32)

    @pl.when(k == pl.num_programs(2) - 1)
    def _finalize():
        out_ref[...] = out_ref[...] * mask_ref[...] + b_ref[...]


# --------------------------------------------------------------------------- #
# Tiling / VMEM helpers
# --------------------------------------------------------------------------- #
def _round_up(x, m):
    return ((x + m - 1) // m) * m


def _pick_tile(dim, target, align):
    """Largest multiple-of-`align` divisor of `dim` that is <= max(target, align).
    `dim` must already be a multiple of `align`."""
    target = max(int(target), align)
    best = align
    cand = align
    while cand <= min(dim, target):
        if dim % cand == 0:
            best = cand
        cand += align
    return min(best, dim)


def _fit_tiles(Bp, Kp, Np, tm_t, tk_t, tn_t, budget):
    tm = _pick_tile(Bp, tm_t, 8)
    tk = _pick_tile(Kp, tk_t, 128)
    tn = _pick_tile(Np, tn_t, 128)

    def est(tm_, tk_, tn_):
        # double-buffered x / weight tiles + resident(+1) out tile + mask + bias
        return 4 * (2 * tm_ * tk_ + 2 * tk_ * tn_ + 2 * tm_ * tn_ + 4 * tn_)

    while est(tm, tk, tn) > budget:
        if tk >= tn and tk > 128:
            tk = _pick_tile(Kp, tk // 2, 128)
        elif tn > 128:
            tn = _pick_tile(Np, tn // 2, 128)
        elif tm > 8:
            tm = _pick_tile(Bp, tm // 2, 8)
        elif tk > 128:
            tk = _pick_tile(Kp, tk // 2, 128)
        else:
            break
    return tm, tk, tn, est(tm, tk, tn)


def _tpu_vmem_capacity():
    try:
        return int(pltpu.get_tpu_info().vmem_capacity_bytes)
    except Exception:
        return 64 * 1024 * 1024   # conservative (v7x-sized) fallback


def _vmem_limit(est_bytes, vmem_cap):
    # Always leave headroom below physical VMEM (v7x: 64 MiB -> cap ~56 MiB);
    # raise above the small default scoped limit whenever the estimate needs it.
    return int(min(vmem_cap * 7 // 8,
                   max(est_bytes * 3 // 2, 32 * 1024 * 1024)))


def _pad2d(a, rows, cols):
    r, c = a.shape
    if r == rows and c == cols:
        return a
    return jnp.pad(a, ((0, rows - r), (0, cols - c)))


# --------------------------------------------------------------------------- #
# Wrapper
# --------------------------------------------------------------------------- #
def masked_mlp_forward(x, weight, bias, threshold, *,
                       tm_target=None, tk_target=None, tn_target=None):
    """x: (B, in_size) f32; weight: (out_size, in_size); bias: (out_size,);
    threshold: scalar.  Returns (B, out_size) f32."""
    B, in_size = x.shape
    out_size, in_size_w = weight.shape
    assert in_size_w == in_size

    x = x.astype(jnp.float32)
    weight = weight.astype(jnp.float32)
    bias = bias.astype(jnp.float32)
    thr1d = jnp.reshape(threshold, (1,)).astype(jnp.float32)

    # Pad to (8, 128)-aligned shapes so all tiles/stores are lane-dense.
    Bp = _round_up(max(B, 8), 8)
    Kp = _round_up(max(in_size, 128), 128)
    Np = _round_up(max(out_size, 128), 128)

    # TODO(synk): in a real model, store the weight as (in, out) to avoid this
    # one-off transpose pass (here it is done in the wrapper).
    wt = _pad2d(jnp.transpose(weight), Kp, Np)          # (Kp, Np)
    xp = _pad2d(x, Bp, Kp)                               # (Bp, Kp)
    bp = _pad2d(bias.reshape(1, out_size), 1, Np)        # (1, Np)

    vmem_cap = _tpu_vmem_capacity()
    if vmem_cap >= 96 * 1024 * 1024:        # v5e / v6e (128 MiB physical)
        d_tm, d_tk, d_tn = 512, 1024, 1024
    else:                                    # v7x (64 MiB physical)
        d_tm, d_tk, d_tn = 256, 512, 512
    tm_t = tm_target if tm_target is not None else d_tm
    tk_t = tk_target if tk_target is not None else d_tk
    tn_t = tn_target if tn_target is not None else d_tn

    budget = min(vmem_cap * 3 // 4, 96 * 1024 * 1024)
    tm, tk, tn, est_bytes = _fit_tiles(Bp, Kp, Np, tm_t, tk_t, tn_t, budget)
    main_vmem_limit = _vmem_limit(est_bytes, vmem_cap)

    # ---------------- mask pre-pass: weight streamed exactly once ----------
    tks = _pick_tile(Kp, max(128, (1 << 20) // Np), 128)
    est_pre = 4 * (2 * tks * Np + 4 * Np)
    mask = pl.pallas_call(
        _make_mask_kernel(in_size, out_size),
        out_shape=jax.ShapeDtypeStruct((1, Np), jnp.float32),
        grid=(Kp // tks,),
        in_specs=[
            pl.BlockSpec(memory_space=pltpu.MemorySpace.SMEM),   # threshold (1,)
            pl.BlockSpec((tks, Np), lambda k: (k, 0)),           # weight slab
        ],
        out_specs=pl.BlockSpec((1, Np), lambda k: (0, 0)),       # resident
        compiler_params=pltpu.CompilerParams(
            dimension_semantics=("arbitrary",),
            vmem_limit_bytes=_vmem_limit(est_pre, vmem_cap)),
    )(thr1d, wt)

    # ---------------- main matmul with fused mask scale + bias -------------
    out_padded = pl.pallas_call(
        _matmul_mask_kernel,
        out_shape=jax.ShapeDtypeStruct((Bp, Np), jnp.float32),
        grid=(Bp // tm, Np // tn, Kp // tk),
        in_specs=[
            pl.BlockSpec((tm, tk), lambda i, j, k: (i, k)),      # x tile
            pl.BlockSpec((tk, tn), lambda i, j, k: (k, j)),      # weight (K,N)
            pl.BlockSpec((1, tn), lambda i, j, k: (0, j)),       # mask row
            pl.BlockSpec((1, tn), lambda i, j, k: (0, j)),       # bias row
        ],
        out_specs=pl.BlockSpec((tm, tn), lambda i, j, k: (i, j)),  # resident over k
        compiler_params=pltpu.CompilerParams(
            dimension_semantics=("parallel", "parallel", "arbitrary"),
            vmem_limit_bytes=main_vmem_limit),
    )(xp, wt, mask, bp)

    return out_padded[:B, :out_size]


# --------------------------------------------------------------------------- #
# Reference + init (match MaskedMLP)
# --------------------------------------------------------------------------- #
def init_params(key, in_size, out_size):
    """Deterministic init matching MaskedMLP.reset_parameters()."""
    kw, kb = jax.random.split(key)
    bound = 1.0 / math.sqrt(in_size)   # kaiming_uniform_(a=sqrt(5)) on (out,in)
    weight = jax.random.uniform(kw, (out_size, in_size), jnp.float32,
                                minval=-bound, maxval=bound)
    bias = jax.random.uniform(kb, (out_size,), jnp.float32,
                              minval=-bound, maxval=bound)
    return weight, bias


def reference_forward(x, weight, bias, threshold):
    """Pure-JAX reference mirroring the PyTorch forward."""
    abs_w = jnp.abs(weight)
    mean_w = jnp.sum(abs_w, axis=1) / float(abs_w.shape[1])
    thr = jnp.maximum(threshold, 0.0)
    mask = (mean_w - thr > 0.0).astype(jnp.float32)
    ratio = jnp.sum(mask) / mask.size
    mask = jnp.where(ratio <= 0.01, (mean_w > 0.0).astype(jnp.float32), mask)
    masked_w = weight * mask[:, None]
    return jnp.matmul(x, masked_w.T, precision=lax.Precision.HIGHEST) + bias


# TODO(synk): BinaryStep.backward and the in-place nn.Parameter side effects
# (threshold reset, self.mask caching) are training-time state; only the
# functional forward output is implemented here.

if __name__ == "__main__":
    key = jax.random.PRNGKey(0)
    kx, kp, kx2, kp2, kx3, kp3 = jax.random.split(key, 6)

    # Config 1: exercises the K-accumulation grid (nk=2) and all mask branches.
    B, in_size, out_size = 16, 256, 128
    x = jax.random.normal(kx, (B, in_size), jnp.float32)
    weight, bias = init_params(kp, in_size, out_size)
    row_means = jnp.mean(jnp.abs(weight), axis=1)
    thresholds = [
        jnp.float32(0.0),        # all rows kept
        jnp.median(row_means),   # ~half the rows masked out
        jnp.float32(10.0),       # ratio <= 1%  -> fallback path (threshold reset)
        jnp.float32(-1.0),       # negative threshold -> clamped to 0
    ]
    for thr in thresholds:
        out = jax.block_until_ready(
            masked_mlp_forward(x, weight, bias, thr, tk_target=128))
        ref = reference_forward(x, weight, bias, thr)
        assert out.shape == (B, out_size)
        assert jnp.allclose(out, ref, atol=1e-4, rtol=1e-4), \
            float(jnp.max(jnp.abs(out - ref)))

    # Config 2: tiny single-block shape, exercises (8,128) padding of in/out.
    B2, in2, out2 = 8, 32, 32
    x2 = jax.random.normal(kx2, (B2, in2), jnp.float32)
    w2, b2 = init_params(kp2, in2, out2)
    out2v = jax.block_until_ready(masked_mlp_forward(x2, w2, b2, jnp.float32(0.0)))
    ref2 = reference_forward(x2, w2, b2, jnp.float32(0.0))
    assert out2v.shape == (B2, out2)
    assert jnp.allclose(out2v, ref2, atol=1e-4, rtol=1e-4)

    # Config 3: non-aligned batch / odd sizes (batch and feature padding path).
    B3, in3, out3 = 2, 48, 96
    x3 = jax.random.normal(kx3, (B3, in3), jnp.float32)
    w3, b3 = init_params(kp3, in3, out3)
    for thr in [jnp.float32(0.0), jnp.float32(5.0)]:
        out3v = jax.block_until_ready(masked_mlp_forward(x3, w3, b3, thr))
        ref3 = reference_forward(x3, w3, b3, thr)
        assert out3v.shape == (B3, out3)
        assert jnp.allclose(out3v, ref3, atol=1e-4, rtol=1e-4)

    print("KERNEL_OK")
</pallas_src>

<mosaic_0001>
module attributes {stable_mosaic.version = 11 : i64} {
  func.func @kernel(%arg0: i32, %arg1: memref<1xf32, #tpu.memory_space<smem>>, %arg2: memref<256x128xf32, #tpu.memory_space<vmem>>, %arg3: memref<1x128xf32, #tpu.memory_space<vmem>>) attributes {dimension_semantics = [#tpu.dimension_semantics<arbitrary>], iteration_bounds = array<i64: 1>, scalar_prefetch = 0 : i64, scratch_operands = 0 : i64, tpu.core_type = #tpu.core_type<tc>, window_params = [{transform_indices = @transform_0, window_bounds = array<i64: 1>}, {transform_indices = @transform_1, window_bounds = array<i64: 256, 128>}, {pipeline_mode = #tpu.pipeline_mode<synchronous>, transform_indices = @transform_2, window_bounds = array<i64: 1, 128>}]} {
    %c0_i32 = arith.constant 0 : i32
    %0 = arith.cmpi eq, %arg0, %c0_i32 : i32
    %1 = arith.extui %0 : i1 to i32
    %c0_i32_0 = arith.constant 0 : i32
    %2 = arith.cmpi ne, %1, %c0_i32_0 : i32
    scf.if %2 {
      %cst_8 = arith.constant 0.000000e+00 : f32
      %13 = vector.broadcast %cst_8 : f32 to vector<1x128xf32>
      %c0_9 = arith.constant 0 : index
      %c0_10 = arith.constant 0 : index
      %14 = vector.load %arg3[%c0_9, %c0_10] : memref<1x128xf32, #tpu.memory_space<vmem>>, vector<1x128xf32>
      tpu.vector_store %arg3[%c0_9, %c0_10], %13 {strides = array<i32>} : memref<1x128xf32, #tpu.memory_space<vmem>>, vector<1x128xf32>,
    } else {
    }
    %c0 = arith.constant 0 : index
    %c0_1 = arith.constant 0 : index
    %3 = vector.load %arg3[%c0, %c0_1] : memref<1x128xf32, #tpu.memory_space<vmem>>, vector<1x128xf32>
    %c0_2 = arith.constant 0 : index
    %c0_3 = arith.constant 0 : index
    %4 = vector.load %arg2[%c0_2, %c0_3] : memref<256x128xf32, #tpu.memory_space<vmem>>, vector<256x128xf32>
    %5 = math.absf %4 : vector<256x128xf32>
    %cst = arith.constant dense<0.000000e+00> : vector<128xf32>
    %6 = vector.multi_reduction <add>, %5, %cst [0] : vector<256x128xf32> to vector<128xf32>
    %7 = vector.shape_cast %6 : vector<128xf32> to vector<1x128xf32>
    %8 = arith.addf %3, %7 : vector<1x128xf32>
    %c0_4 = arith.constant 0 : index
    %c0_5 = arith.constant 0 : index
    %9 = vector.load %arg3[%c0_4, %c0_5] : memref<1x128xf32, #tpu.memory_space<vmem>>, vector<1x128xf32>
    tpu.vector_store %arg3[%c0_4, %c0_5], %8 {strides = array<i32>} : memref<1x128xf32, #tpu.memory_space<vmem>>, vector<1x128xf32>,
    %c0_i32_6 = arith.constant 0 : i32
    %10 = arith.cmpi eq, %arg0, %c0_i32_6 : i32
    %11 = arith.extui %10 : i1 to i32
    %c0_i32_7 = arith.constant 0 : i32
    %12 = arith.cmpi ne, %11, %c0_i32_7 : i32
    scf.if %12 {
      %c0_8 = arith.constant 0 : index
      %c0_9 = arith.constant 0 : index
      %13 = vector.load %arg3[%c0_8, %c0_9] : memref<1x128xf32, #tpu.memory_space<vmem>>, vector<1x128xf32>
      %cst_10 = arith.constant 3.906250e-03 : f32
      %14 = vector.broadcast %cst_10 : f32 to vector<1x128xf32>
      %15 = arith.mulf %13, %14 : vector<1x128xf32>
      %c0_11 = arith.constant 0 : index
      %16 = memref.load %arg1[%c0_11] : memref<1xf32, #tpu.memory_space<smem>>
      %cst_12 = arith.constant 0.000000e+00 : f32
      %17 = arith.maximumf %16, %cst_12 : f32
      %18 = vector.broadcast %17 : f32 to vector<1x128xf32>
      %19 = arith.subf %15, %18 : vector<1x128xf32>
      %cst_13 = arith.constant 0.000000e+00 : f32
      %20 = vector.broadcast %cst_13 : f32 to vector<1x128xf32>
      %21 = arith.cmpf ogt, %19, %20 : vector<1x128xf32>
      %22 = arith.extui %21 : vector<1x128xi1> to vector<1x128xi32>
      %23 = arith.sitofp %22 : vector<1x128xi32> to vector<1x128xf32>
      %24 = vector.shape_cast %23 : vector<1x128xf32> to vector<1x1x128xf32>
      %cst_14 = arith.constant dense<0.000000e+00> : vector<1xf32>
      %25 = vector.multi_reduction <add>, %24, %cst_14 [1, 2] : vector<1x1x128xf32> to vector<1xf32>
      %26 = vector.shape_cast %25 : vector<1xf32> to vector<1x1x1xf32>
      %27 = vector.extract %26[0, 0, 0] : f32 from vector<1x1x1xf32>
      %cst_15 = arith.constant 7.812500e-03 : f32
      %28 = arith.mulf %27, %cst_15 : f32
      %cst_16 = arith.constant 0.000000e+00 : f32
      %29 = vector.broadcast %cst_16 : f32 to vector<1x128xf32>
      %30 = arith.cmpf ogt, %15, %29 : vector<1x128xf32>
      %31 = arith.extui %30 : vector<1x128xi1> to vector<1x128xi32>
      %32 = arith.sitofp %31 : vector<1x128xi32> to vector<1x128xf32>
      %cst_17 = arith.constant 0.00999999977 : f32
      %33 = arith.cmpf ole, %28, %cst_17 : f32
      %34 = arith.select %33, %32, %23 : vector<1x128xf32>
      %c0_18 = arith.constant 0 : index
      %c0_19 = arith.constant 0 : index
      %35 = vector.load %arg3[%c0_18, %c0_19] : memref<1x128xf32, #tpu.memory_space<vmem>>, vector<1x128xf32>
      tpu.vector_store %arg3[%c0_18, %c0_19], %34 {strides = array<i32>} : memref<1x128xf32, #tpu.memory_space<vmem>>, vector<1x128xf32>,
    } else {
    }
    return
  }
  func.func @transform_0(%arg0: i32) -> i32 {
    %c0_i32 = arith.constant 0 : i32
    %c0_i32_0 = arith.constant 0 : i32
    return %c0_i32 : i32
  }
  func.func @transform_1(%arg0: i32) -> (i32, i32) {
    %c0_i32 = arith.constant 0 : i32
    %c0_i32_0 = arith.constant 0 : i32
    return %arg0, %c0_i32 : i32, i32
  }
  func.func @transform_2(%arg0: i32) -> (i32, i32) {
    %c0_i32 = arith.constant 0 : i32
    %c0_i32_0 = arith.constant 0 : i32
    %c0_i32_1 = arith.constant 0 : i32
    return %c0_i32, %c0_i32_0 : i32, i32
  }
}

</mosaic_0001>

<llo_original>
// kernel: tpu_custom_call.1
$region0: #{tpu_custom_call.1}
  #allocation0 [shape = 'u32[]', space=smem, size = 0x4, offset = 0x4, fixed_abs, tag = 'smem constant byte address 0x4 - core index']
  #allocation1 [shape = 'u32[144,128]{1,0:T(1,128)}', space=vmem, size = 0x12000, scoped, tag = 'internal scratch']
  #allocation2 [shape = 'f32[1]{0:T(128)S(6)}', space=smem, size = 0x200, scoped, tag = 'scoped memory for tpu_custom_call.1']
  %s0 = inlined_call_operand.<no memory space> [shape: f32[1], index: 0, kind: input, shape index: {}]
  %s1 = inlined_call_operand.hbm [shape: f32[256,128], index: 1, kind: input, shape index: {}]
  %s2 = inlined_call_operand.hbm [shape: f32[1,128], index: 2, kind: output, shape index: {}]
  %s3 = sld [smem:[#allocation0]]
  $region30: #{tpu_custom_call.1} parent=0
    _
  %s5 = ssub.s32 1, %s3
  %s6 = scalar_select 0, %s5, %s3
  %7 = sst [smem:[#allocation2]] %s0
  $region1: #{tpu_custom_call.1} parent=0
    #allocation3 [shape = 'u8[131072]{0}', space=vmem, size = 0x20000, scoped, tag = 'input window, operand 1, single buffered']
    #allocation4 [shape = 's32[1]{0}', space=sflag, size = 0x4, scoped, tag = 'scoped memory for tpu_custom_call.1']
    #allocation5 [shape = 's32[1]{0}', space=sflag, size = 0x4, scoped, tag = 'scoped memory for tpu_custom_call.1']
    #allocation6 [shape = 'u8[512]{0}', space=vmem, size = 0x400, scoped, tag = 'output window, operand 0, single buffered']
    %8 = vsyncpa [#allocation4], 0
    %9 = vsyncpa [#allocation5], 0
    // Predicated region
    $region2: #{tpu_custom_call.1} parent=1 // pred_check
      _
    $region3: #{tpu_custom_call.1} parent=1 // pred_check_branch
      %11 = sbr.rel (0) target = $region5
    $region4: #{tpu_custom_call.1} parent=1 // pred_region
      _
    $region5: #{tpu_custom_call.1} parent=1 // pred_fallthru
      _
    // Predicated region
    $region6: #{tpu_custom_call.1} parent=1 // pred_check
      _
    $region7: #{tpu_custom_call.1} parent=1 // pred_check_branch
      %13 = sbr.rel (0) target = $region9
    $region8: #{tpu_custom_call.1} parent=1 // pred_region
      %s15 = ssub.s32 4096, 4096
      %16 = vsyncadd [#allocation4], %s15
      %s17 = sshll.u32 [#allocation3], 4
      %s18 = int_to_ptr.vmem [resolvable:$true] %s17
      %23 = dma.hbm_to_vmem [thread:$0]  %s1, 4096, %s18, [#allocation4], 128, 128, 8
    $region9: #{tpu_custom_call.1} parent=1 // pred_fallthru
      _
    // Predicated region
    $region10: #{tpu_custom_call.1} parent=1 // pred_check
      _
    $region11: #{tpu_custom_call.1} parent=1 // pred_check_branch
      %25 = sbr.rel (0) target = $region13
    $region12: #{tpu_custom_call.1} parent=1 // pred_region
      %26 = dma.done [#allocation4], 4096
    $region13: #{tpu_custom_call.1} parent=1 // pred_fallthru
      _
    %p27 = scmp.eq.s32.totalorder 0, 0
    // Predicated region
    $region14: #{tpu_custom_call.1} parent=1 // pred_check
      %p28 = pneg %p27
    $region15: #{tpu_custom_call.1} parent=1 // pred_check_branch
      %30 = sbr.rel (%p28) target = $region17
    $region16: #{tpu_custom_call.1} parent=1 // pred_region
      %31 = vst [vmem:[#allocation6] sm:$0x1] 0.0
    $region17: #{tpu_custom_call.1} parent=1 // pred_fallthru
      _
    %v32 = vld [vmem:[#allocation6] sm:$0x1]
    %v33 = vld [vmem:[#allocation3] sm:$0xff]
    %v34 = vld [vmem:[#allocation3 + $0x8] sm:$0xff]
    %v35 = vld [vmem:[#allocation3 + $0x10] sm:$0xff]
    %v36 = vld [vmem:[#allocation3 + $0x18] sm:$0xff]
    %v37 = vld [vmem:[#allocation3 + $0x20] sm:$0xff]
    %v38 = vld [vmem:[#allocation3 + $0x28] sm:$0xff]
    %v39 = vld [vmem:[#allocation3 + $0x30] sm:$0xff]
    %v40 = vld [vmem:[#allocation3 + $0x38] sm:$0xff]
    %v41 = vld [vmem:[#allocation3 + $0x40] sm:$0xff]
    %v42 = vld [vmem:[#allocation3 + $0x48] sm:$0xff]
    %v43 = vld [vmem:[#allocation3 + $0x50] sm:$0xff]
    %v44 = vld [vmem:[#allocation3 + $0x58] sm:$0xff]
    %v45 = vld [vmem:[#allocation3 + $0x60] sm:$0xff]
    %v46 = vld [vmem:[#allocation3 + $0x68] sm:$0xff]
    %v47 = vld [vmem:[#allocation3 + $0x70] sm:$0xff]
    %v48 = vld [vmem:[#allocation3 + $0x78] sm:$0xff]
    %v49 = vld [vmem:[#allocation3 + $0x80] sm:$0xff]
    %v50 = vld [vmem:[#allocation3 + $0x88] sm:$0xff]
    %v51 = vld [vmem:[#allocation3 + $0x90] sm:$0xff]
    %v52 = vld [vmem:[#allocation3 + $0x98] sm:$0xff]
    %v53 = vld [vmem:[#allocation3 + $0xa0] sm:$0xff]
    %v54 = vld [vmem:[#allocation3 + $0xa8] sm:$0xff]
    %v55 = vld [vmem:[#allocation3 + $0xb0] sm:$0xff]
    %v56 = vld [vmem:[#allocation3 + $0xb8] sm:$0xff]
    %v57 = vld [vmem:[#allocation3 + $0xc0] sm:$0xff]
    %v58 = vld [vmem:[#allocation3 + $0xc8] sm:$0xff]
    %v59 = vld [vmem:[#allocation3 + $0xd0] sm:$0xff]
    %v60 = vld [vmem:[#allocation3 + $0xd8] sm:$0xff]
    %v61 = vld [vmem:[#allocation3 + $0xe0] sm:$0xff]
    %v62 = vld [vmem:[#allocation3 + $0xe8] sm:$0xff]
    %v63 = vld [vmem:[#allocation3 + $0xf0] sm:$0xff]
    %v64 = vld [vmem:[#allocation3 + $0xf8] sm:$0xff]
    %v65 = vand.u32 2147483647, %v33
    %v66 = vand.u32 2147483647, %v34
    %v67 = vand.u32 2147483647, %v35
    %v68 = vand.u32 2147483647, %v36
    %v69 = vand.u32 2147483647, %v37
    %v70 = vand.u32 2147483647, %v38
    %v71 = vand.u32 2147483647, %v39
    %v72 = vand.u32 2147483647, %v40
    %v73 = vand.u32 2147483647, %v41
    %v74 = vand.u32 2147483647, %v42
    %v75 = vand.u32 2147483647, %v43
    %v76 = vand.u32 2147483647, %v44
    %v77 = vand.u32 2147483647, %v45
    %v78 = vand.u32 2147483647, %v46
    %v79 = vand.u32 2147483647, %v47
    %v80 = vand.u32 2147483647, %v48
    %v81 = vand.u32 2147483647, %v49
    %v82 = vand.u32 2147483647, %v50
    %v83 = vand.u32 2147483647, %v51
    %v84 = vand.u32 2147483647, %v52
    %v85 = vand.u32 2147483647, %v53
    %v86 = vand.u32 2147483647, %v54
    %v87 = vand.u32 2147483647, %v55
    %v88 = vand.u32 2147483647, %v56
    %v89 = vand.u32 2147483647, %v57
    %v90 = vand.u32 2147483647, %v58
    %v91 = vand.u32 2147483647, %v59
    %v92 = vand.u32 2147483647, %v60
    %v93 = vand.u32 2147483647, %v61
    %v94 = vand.u32 2147483647, %v62
    %v95 = vand.u32 2147483647, %v63
    %v96 = vand.u32 2147483647, %v64
    %v97 = vadd.f32 %v65, %v66
    %v98 = vadd.f32 %v97, %v67
    %v99 = vadd.f32 %v98, %v68
    %v100 = vadd.f32 %v99, %v69
    %v101 = vadd.f32 %v100, %v70
    %v102 = vadd.f32 %v101, %v71
    %v103 = vadd.f32 %v102, %v72
    %v104 = vadd.f32 %v103, %v73
    %v105 = vadd.f32 %v104, %v74
    %v106 = vadd.f32 %v105, %v75
    %v107 = vadd.f32 %v106, %v76
    %v108 = vadd.f32 %v107, %v77
    %v109 = vadd.f32 %v108, %v78
    %v110 = vadd.f32 %v109, %v79
    %v111 = vadd.f32 %v110, %v80
    %v112 = vadd.f32 %v111, %v81
    %v113 = vadd.f32 %v112, %v82
    %v114 = vadd.f32 %v113, %v83
    %v115 = vadd.f32 %v114, %v84
    %v116 = vadd.f32 %v115, %v85
    %v117 = vadd.f32 %v116, %v86
    %v118 = vadd.f32 %v117, %v87
    %v119 = vadd.f32 %v118, %v88
    %v120 = vadd.f32 %v119, %v89
    %v121 = vadd.f32 %v120, %v90
    %v122 = vadd.f32 %v121, %v91
    %v123 = vadd.f32 %v122, %v92
    %v124 = vadd.f32 %v123, %v93
    %v125 = vadd.f32 %v124, %v94
    %v126 = vadd.f32 %v125, %v95
    %v127 = vadd.f32 %v126, %v96
    %v128 = vrot.slane %v127, 4
    %v129 = vadd.f32 %v127, %v128
    %v130 = vrot.slane %v129, 2
    %v131 = vadd.f32 %v129, %v130
    %v132 = vrot.slane %v131, 1
    %v133 = vadd.f32 %v131, %v132
    %v134 = vadd.f32 %v32, %v133
    %135 = vst [vmem:[#allocation6] sm:$0x1] %v134
    // Predicated region
    $region18: #{tpu_custom_call.1} parent=1 // pred_check
      %p136 = pneg %p27
    $region19: #{tpu_custom_call.1} parent=1 // pred_check_branch
      %138 = sbr.rel (%p136) target = $region21
    $region20: #{tpu_custom_call.1} parent=1 // pred_region
      %v139 = vld [vmem:[#allocation6] sm:$0x1]
      %v140 = vmul.f32 %v139, 0.00390625
      %s141 = sld [smem:[#allocation2]]
      %s142 = smax.f32 %s141, 0.0
      %v143 = vstv %s142
      %v144 = vsub.f32 %v140, %v143
      %vm145 = vcmp.gt.f32.partialorder %v144, 0.0
      %v146 = vsel %vm145, 1, 0
      %v147 = vcvt.s32.f32 %v146
      %vm148 = vcmask 1040384
      %v149 = vsel %vm148, %v147, 0.0
      %150 = vadd.xlane.f32.xlu0 %v149
      %v151 = vpop.xlane.xlu0 %150
      %v152 = vrot.slane %v151, 4
      %v153 = vadd.f32 %v151, %v152
      %v154 = vrot.slane %v153, 2
      %v155 = vadd.f32 %v153, %v154
      %v156 = vrot.slane %v155, 1
      %v157 = vadd.f32 %v155, %v156
      %s158 = vtos %v157
      %s159 = smul.f32 %s158, 0.0078125
      %vm160 = vcmp.gt.f32.partialorder %v140, 0.0
      %v161 = vsel %vm160, 1, 0
      %v162 = vcvt.s32.f32 %v161
      %p163 = scmp.le.f32.partialorder %s159, 0.01
      %s164 = scalar_select %p163, 1, 0
      %v165 = vstv %s164
      %vm166 = vcmp.eq.s32.totalorder %v165, 1
      %v167 = vsel %vm166, %v162, %v147
      %168 = vst [vmem:[#allocation6] sm:$0x1] %v167
    $region21: #{tpu_custom_call.1} parent=1 // pred_fallthru
      _
    // Predicated region
    $region22: #{tpu_custom_call.1} parent=1 // pred_check
      _
    $region23: #{tpu_custom_call.1} parent=1 // pred_check_branch
      %170 = sbr.rel (0) target = $region25
    $region24: #{tpu_custom_call.1} parent=1 // pred_region
      %s172 = ssub.s32 16, 16
      %173 = vsyncadd [#allocation5], %s172
      %s175 = sshll.u32 [#allocation6], 4
      %s176 = int_to_ptr.vmem [resolvable:$true] %s175
      %178 = dma.vmem_to_hbm [thread:$0]  %s176, 16, %s2, [#allocation5]
    $region25: #{tpu_custom_call.1} parent=1 // pred_fallthru
      _
    // Predicated region
    $region26: #{tpu_custom_call.1} parent=1 // pred_check
      _
    $region27: #{tpu_custom_call.1} parent=1 // pred_check_branch
      %180 = sbr.rel (0) target = $region29
    $region28: #{tpu_custom_call.1} parent=1 // pred_region
      %181 = dma.done [#allocation5], 16
    $region29: #{tpu_custom_call.1} parent=1 // pred_fallthru
      _
    %182 = vsyncpa [#allocation4], 1
    %183 = vsyncpa [#allocation5], 1

</llo_original>
